<compile_context>
chip_gen: v6e
topology: v6e:2x2x1
jax: 0.10.0
libtpu: 0.0.40
codegen_flags: <defaults>
</compile_context>

<pallas_src>
import functools

import jax
import jax.numpy as jnp
from jax.experimental import pallas as pl
from jax.experimental.pallas import tpu as pltpu

LANE = 128          # lane width
TILE_ROWS = 1024    # rows per grid step (512 KiB per f32 input tile)
NUM_SLICES = 2      # leading "parallel" grid axis (both TCs on v7x)
EPS = 1e-4


def _pow_gamma(x, gamma):
    """x ** gamma, specialized to VPU multiplies for small integer gamma."""
    g = float(gamma)
    if g == int(g) and 0 <= int(g) <= 4:
        gi = int(g)
        if gi == 0:
            return jnp.ones_like(x)
        r = x
        for _ in range(gi - 1):
            r = r * x
        return r
    return jnp.power(x, gamma)   # EUP fallback for non-integer gamma


def _focal_loss_kernel(p_ref, t_ref, out_ref, *, alpha, gamma, n_valid,
                       tile_rows, steps_per_core):
    c = pl.program_id(0)          # slice (TensorCore) index
    i = pl.program_id(1)          # row-block index within the slice

    # out_ref is a (1, 3, 8, LANE) accumulator, VMEM-resident across the i axis:
    #   [0]: sum of per-element BCE terms
    #   [1]: sum of masked focal weights
    #   [2]: sum of targets
    @pl.when(i == 0)
    def _():
        out_ref[...] = jnp.zeros_like(out_ref)

    p = jnp.clip(p_ref[...], EPS, 1.0 - EPS)
    t = t_ref[...]

    # In-kernel validity mask for the padding tail (no mask array streamed from HBM).
    block_row0 = (c * steps_per_core + i) * tile_rows
    row_idx = jax.lax.broadcasted_iota(jnp.int32, (tile_rows, LANE), 0) + block_row0
    lane_idx = jax.lax.broadcasted_iota(jnp.int32, (tile_rows, LANE), 1)
    valid = (row_idx * LANE + lane_idx) < n_valid

    # Per-element BCE terms; mean over the n_valid real elements equals
    # F.binary_cross_entropy(reduction='mean').
    bce = -(t * jnp.log(p) + (1.0 - t) * jnp.log(1.0 - p))

    is_pos = t == 1.0
    alpha_factor = jnp.where(is_pos, alpha, 1.0 - alpha)
    focal = alpha_factor * _pow_gamma(jnp.where(is_pos, 1.0 - p, p), gamma)
    focal = jnp.where(t != -1.0, focal, 0.0)   # ignore label == -1

    zero = jnp.zeros_like(p)
    bce = jnp.where(valid, bce, zero)
    focal = jnp.where(valid, focal, zero)
    tmask = jnp.where(valid, t, zero)

    # Fold (tile_rows, LANE) -> (8, LANE) with pure VPU vreg adds, accumulate.
    fold = (tile_rows // 8, 8, LANE)
    out_ref[0, 0] += jnp.sum(bce.reshape(fold), axis=0)
    out_ref[0, 1] += jnp.sum(focal.reshape(fold), axis=0)
    out_ref[0, 2] += jnp.sum(tmask.reshape(fold), axis=0)


def focal_loss_pallas(predicts, targets, alpha=0.5, gamma=2.0, is_average=True):
    batch = predicts.shape[0]
    p = predicts.astype(jnp.float32).reshape(-1)
    t = targets.astype(jnp.float32).reshape(-1)
    n = p.shape[0]

    rows = -(-n // LANE)
    tile_rows = min(TILE_ROWS, -(-rows // 8) * 8)       # sublane-aligned
    blocks = -(-rows // tile_rows)
    blocks = -(-blocks // NUM_SLICES) * NUM_SLICES      # even split across slices
    rows_pad = blocks * tile_rows
    n_pad = rows_pad * LANE
    steps_per_core = blocks // NUM_SLICES

    if n_pad > n:        # single fused pad; the tail is masked in-kernel via iota
        p = jnp.pad(p, (0, n_pad - n))
        t = jnp.pad(t, (0, n_pad - n))
    p2 = p.reshape(rows_pad, LANE)
    t2 = t.reshape(rows_pad, LANE)

    kernel = functools.partial(
        _focal_loss_kernel,
        alpha=float(alpha), gamma=float(gamma), n_valid=int(n),
        tile_rows=tile_rows, steps_per_core=steps_per_core)

    in_map = lambda c, i: (c * steps_per_core + i, 0)

    partials = pl.pallas_call(
        kernel,
        out_shape=jax.ShapeDtypeStruct((NUM_SLICES, 3, 8, LANE), jnp.float32),
        grid_spec=pltpu.PrefetchScalarGridSpec(
            num_scalar_prefetch=0,
            grid=(NUM_SLICES, steps_per_core),
            in_specs=[pl.BlockSpec((tile_rows, LANE), in_map),
                      pl.BlockSpec((tile_rows, LANE), in_map)],
            out_specs=pl.BlockSpec((1, 3, 8, LANE),
                                   lambda c, i: (c, 0, 0, 0))),
        compiler_params=pltpu.CompilerParams(
            dimension_semantics=("parallel", "arbitrary")),
    )(p2, t2)

    # Tiny epilogue: reduce 2*3*8*128 partials to the scalar loss.
    sums = jnp.sum(partials, axis=(0, 2, 3))
    bce_mean = sums[0] / jnp.float32(n)
    loss = bce_mean * sums[1] / jnp.maximum(sums[2], 1.0)
    scale = 1.0 if is_average else float(batch)
    return loss * scale


def focal_loss_ref(predicts, targets, alpha=0.5, gamma=2.0, is_average=True):
    """Pure-JAX transcription of the PyTorch forward, for validation."""
    predicts = predicts.astype(jnp.float32)
    targets = targets.astype(jnp.float32)
    batch = predicts.shape[0]
    predicts = jnp.clip(predicts, EPS, 1.0 - EPS)
    alpha_factor = jnp.where(targets == 1.0, alpha, 1.0 - alpha)
    focal_weight = jnp.where(targets == 1.0, 1.0 - predicts, predicts)
    focal_weight = alpha_factor * focal_weight ** gamma
    bce = jnp.mean(-(targets * jnp.log(predicts)
                     + (1.0 - targets) * jnp.log(1.0 - predicts)))
    cls_loss = focal_weight * bce
    cls_loss = jnp.where(targets != -1.0, cls_loss, 0.0)
    cls_loss = cls_loss.sum() / jnp.maximum(targets.sum(), 1.0)
    return cls_loss if is_average else cls_loss * batch


if __name__ == "__main__":
    key = jax.random.PRNGKey(0)
    k_p, k_t, k_ign = jax.random.split(key, 3)

    # Case 1: lane-aligned shape.
    B, C, H, W = 2, 4, 16, 16
    predicts = jax.random.uniform(k_p, (B, C, H, W), jnp.float32,
                                  minval=0.0, maxval=1.0)
    labels = jax.random.bernoulli(k_t, 0.3, (B, C, H, W)).astype(jnp.float32)
    ignore = jax.random.bernoulli(k_ign, 0.1, (B, C, H, W))
    targets = jnp.where(ignore, -1.0, labels)   # -1 marks ignored positions

    for is_average in (True, False):
        out = focal_loss_pallas(predicts, targets, alpha=0.5, gamma=2.0,
                                is_average=is_average)
        out = jax.block_until_ready(out)
        ref = focal_loss_ref(predicts, targets, alpha=0.5, gamma=2.0,
                             is_average=is_average)
        assert jnp.allclose(out, ref, rtol=1e-5, atol=1e-6), (out, ref)

    # Case 2: non-lane-aligned shape (exercises the in-kernel tail mask).
    B2, C2, H2, W2 = 2, 3, 15, 17
    k_p2, k_t2 = jax.random.split(k_p)
    predicts2 = jax.random.uniform(k_p2, (B2, C2, H2, W2), jnp.float32,
                                   minval=0.0, maxval=1.0)
    labels2 = jax.random.bernoulli(k_t2, 0.4, (B2, C2, H2, W2)).astype(jnp.float32)
    out2 = jax.block_until_ready(
        focal_loss_pallas(predicts2, labels2, alpha=0.25, gamma=2.0))
    ref2 = focal_loss_ref(predicts2, labels2, alpha=0.25, gamma=2.0)
    assert jnp.allclose(out2, ref2, rtol=1e-5, atol=1e-6), (out2, ref2)

    print("KERNEL_OK")
</pallas_src>

<mosaic_0001>
module attributes {stable_mosaic.version = 11 : i64} {
  func.func @_focal_loss_kernel(%arg0: i32, %arg1: i32, %arg2: memref<16x128xf32, #tpu.memory_space<vmem>>, %arg3: memref<16x128xf32, #tpu.memory_space<vmem>>, %arg4: memref<1x3x8x128xf32, #tpu.memory_space<vmem>>) attributes {dimension_semantics = [#tpu.dimension_semantics<parallel>, #tpu.dimension_semantics<arbitrary>], iteration_bounds = array<i64: 2, 1>, scalar_prefetch = 0 : i64, scratch_operands = 0 : i64, tpu.core_type = #tpu.core_type<tc>, window_params = [{transform_indices = @transform_0, window_bounds = array<i64: 16, 128>}, {transform_indices = @transform_1, window_bounds = array<i64: 16, 128>}, {transform_indices = @transform_2, window_bounds = array<i64: 1, 3, 8, 128>}]} {
    %c0_i32 = arith.constant 0 : i32
    %0 = arith.cmpi eq, %arg1, %c0_i32 : i32
    %1 = arith.extui %0 : i1 to i32
    %c0_i32_0 = arith.constant 0 : i32
    %2 = arith.cmpi ne, %1, %c0_i32_0 : i32
    scf.if %2 {
      %cst_40 = arith.constant 0.000000e+00 : f32
      %74 = vector.broadcast %cst_40 : f32 to vector<1x3x8x128xf32>
      %c0_41 = arith.constant 0 : index
      %c0_42 = arith.constant 0 : index
      %c0_43 = arith.constant 0 : index
      %c0_44 = arith.constant 0 : index
      %75 = vector.load %arg4[%c0_41, %c0_42, %c0_43, %c0_44] : memref<1x3x8x128xf32, #tpu.memory_space<vmem>>, vector<1x3x8x128xf32>
      tpu.vector_store %arg4[%c0_41, %c0_42, %c0_43, %c0_44], %74 {strides = array<i32>} : memref<1x3x8x128xf32, #tpu.memory_space<vmem>>, vector<1x3x8x128xf32>,
    } else {
    }
    %c0 = arith.constant 0 : index
    %c0_1 = arith.constant 0 : index
    %3 = vector.load %arg2[%c0, %c0_1] : memref<16x128xf32, #tpu.memory_space<vmem>>, vector<16x128xf32>
    %cst = arith.constant 9.99999974E-5 : f32
    %cst_2 = arith.constant 0.999899983 : f32
    %4 = vector.broadcast %cst : f32 to vector<16x128xf32>
    %5 = arith.maximumf %4, %3 : vector<16x128xf32>
    %6 = vector.broadcast %cst_2 : f32 to vector<16x128xf32>
    %7 = arith.minimumf %6, %5 : vector<16x128xf32>
    %c0_3 = arith.constant 0 : index
    %c0_4 = arith.constant 0 : index
    %8 = vector.load %arg3[%c0_3, %c0_4] : memref<16x128xf32, #tpu.memory_space<vmem>>, vector<16x128xf32>
    %c1_i32 = arith.constant 1 : i32
    %9 = arith.muli %arg0, %c1_i32 : i32
    %10 = arith.addi %9, %arg1 : i32
    %c16_i32 = arith.constant 16 : i32
    %11 = arith.muli %10, %c16_i32 : i32
    %12 = tpu.iota {dimensions = array<i32: 0>} : vector<16x128xi32>
    %13 = vector.broadcast %11 : i32 to vector<16x128xi32>
    %14 = arith.addi %12, %13 : vector<16x128xi32>
    %15 = tpu.iota {dimensions = array<i32: 1>} : vector<16x128xi32>
    %c128_i32 = arith.constant 128 : i32
    %16 = vector.broadcast %c128_i32 : i32 to vector<16x128xi32>
    %17 = arith.muli %14, %16 : vector<16x128xi32>
    %18 = arith.addi %17, %15 : vector<16x128xi32>
    %c2048_i32 = arith.constant 2048 : i32
    %19 = vector.broadcast %c2048_i32 : i32 to vector<16x128xi32>
    %20 = arith.cmpi slt, %18, %19 : vector<16x128xi32>
    %21 = math.log %7 : vector<16x128xf32>
    %22 = arith.mulf %8, %21 : vector<16x128xf32>
    %cst_5 = arith.constant 1.000000e+00 : f32
    %23 = vector.broadcast %cst_5 : f32 to vector<16x128xf32>
    %24 = arith.subf %23, %8 : vector<16x128xf32>
    %cst_6 = arith.constant 1.000000e+00 : f32
    %25 = vector.broadcast %cst_6 : f32 to vector<16x128xf32>
    %26 = arith.subf %25, %7 : vector<16x128xf32>
    %27 = math.log %26 : vector<16x128xf32>
    %28 = arith.mulf %24, %27 : vector<16x128xf32>
    %29 = arith.addf %22, %28 : vector<16x128xf32>
    %cst_7 = arith.constant 0.000000e+00 : f32
    %30 = vector.broadcast %cst_7 : f32 to vector<16x128xf32>
    %31 = arith.subf %30, %29 : vector<16x128xf32>
    %cst_8 = arith.constant 1.000000e+00 : f32
    %32 = vector.broadcast %cst_8 : f32 to vector<16x128xf32>
    %33 = arith.cmpf oeq, %8, %32 : vector<16x128xf32>
    %cst_9 = arith.constant 5.000000e-01 : f32
    %cst_10 = arith.constant 5.000000e-01 : f32
    %34 = vector.broadcast %cst_9 : f32 to vector<16x128xf32>
    %35 = vector.broadcast %cst_10 : f32 to vector<16x128xf32>
    %36 = arith.select %33, %34, %35 : vector<16x128xi1>, vector<16x128xf32>
    %cst_11 = arith.constant 1.000000e+00 : f32
    %37 = vector.broadcast %cst_11 : f32 to vector<16x128xf32>
    %38 = arith.subf %37, %7 : vector<16x128xf32>
    %39 = arith.select %33, %38, %7 : vector<16x128xi1>, vector<16x128xf32>
    %40 = arith.mulf %39, %39 : vector<16x128xf32>
    %41 = arith.mulf %36, %40 : vector<16x128xf32>
    %cst_12 = arith.constant -1.000000e+00 : f32
    %42 = vector.broadcast %cst_12 : f32 to vector<16x128xf32>
    %43 = arith.cmpf one, %8, %42 : vector<16x128xf32>
    %cst_13 = arith.constant 0.000000e+00 : f32
    %44 = vector.broadcast %cst_13 : f32 to vector<16x128xf32>
    %45 = arith.select %43, %41, %44 : vector<16x128xi1>, vector<16x128xf32>
    %cst_14 = arith.constant 0.000000e+00 : f32
    %46 = vector.broadcast %cst_14 : f32 to vector<16x128xf32>
    %47 = arith.select %20, %31, %46 : vector<16x128xi1>, vector<16x128xf32>
    %48 = arith.select %20, %45, %46 : vector<16x128xi1>, vector<16x128xf32>
    %49 = arith.select %20, %8, %46 : vector<16x128xi1>, vector<16x128xf32>
    %c0_15 = arith.constant 0 : index
    %c0_16 = arith.constant 0 : index
    %c0_17 = arith.constant 0 : index
    %c0_18 = arith.constant 0 : index
    %50 = vector.load %arg4[%c0_15, %c0_16, %c0_17, %c0_18] : memref<1x3x8x128xf32, #tpu.memory_space<vmem>>, vector<1x1x8x128xf32>
    %51 = vector.shape_cast %50 : vector<1x1x8x128xf32> to vector<8x128xf32>
    %52 = vector.shape_cast %47 : vector<16x128xf32> to vector<2x8x128xf32>
    %cst_19 = arith.constant dense<0.000000e+00> : vector<8x128xf32>
    %53 = vector.multi_reduction <add>, %52, %cst_19 [0] : vector<2x8x128xf32> to vector<8x128xf32>
    %54 = arith.addf %51, %53 : vector<8x128xf32>
    %c0_20 = arith.constant 0 : index
    %c0_21 = arith.constant 0 : index
    %c0_22 = arith.constant 0 : index
    %c0_23 = arith.constant 0 : index
    %55 = vector.load %arg4[%c0_20, %c0_21, %c0_22, %c0_23] : memref<1x3x8x128xf32, #tpu.memory_space<vmem>>, vector<1x1x8x128xf32>
    %56 = vector.shape_cast %55 : vector<1x1x8x128xf32> to vector<8x128xf32>
    %57 = vector.shape_cast %54 : vector<8x128xf32> to vector<1x1x8x128xf32>
    tpu.vector_store %arg4[%c0_20, %c0_21, %c0_22, %c0_23], %57 {strides = array<i32>} : memref<1x3x8x128xf32, #tpu.memory_space<vmem>>, vector<1x1x8x128xf32>,
    %c0_24 = arith.constant 0 : index
    %c1 = arith.constant 1 : index
    %c0_25 = arith.constant 0 : index
    %c0_26 = arith.constant 0 : index
    %58 = vector.load %arg4[%c0_24, %c1, %c0_25, %c0_26] : memref<1x3x8x128xf32, #tpu.memory_space<vmem>>, vector<1x1x8x128xf32>
    %59 = vector.shape_cast %58 : vector<1x1x8x128xf32> to vector<8x128xf32>
    %60 = vector.shape_cast %48 : vector<16x128xf32> to vector<2x8x128xf32>
    %cst_27 = arith.constant dense<0.000000e+00> : vector<8x128xf32>
    %61 = vector.multi_reduction <add>, %60, %cst_27 [0] : vector<2x8x128xf32> to vector<8x128xf32>
    %62 = arith.addf %59, %61 : vector<8x128xf32>
    %c0_28 = arith.constant 0 : index
    %c1_29 = arith.constant 1 : index
    %c0_30 = arith.constant 0 : index
    %c0_31 = arith.constant 0 : index
    %63 = vector.load %arg4[%c0_28, %c1_29, %c0_30, %c0_31] : memref<1x3x8x128xf32, #tpu.memory_space<vmem>>, vector<1x1x8x128xf32>
    %64 = vector.shape_cast %63 : vector<1x1x8x128xf32> to vector<8x128xf32>
    %65 = vector.shape_cast %62 : vector<8x128xf32> to vector<1x1x8x128xf32>
    tpu.vector_store %arg4[%c0_28, %c1_29, %c0_30, %c0_31], %65 {strides = array<i32>} : memref<1x3x8x128xf32, #tpu.memory_space<vmem>>, vector<1x1x8x128xf32>,
    %c0_32 = arith.constant 0 : index
    %c2 = arith.constant 2 : index
    %c0_33 = arith.constant 0 : index
    %c0_34 = arith.constant 0 : index
    %66 = vector.load %arg4[%c0_32, %c2, %c0_33, %c0_34] : memref<1x3x8x128xf32, #tpu.memory_space<vmem>>, vector<1x1x8x128xf32>
    %67 = vector.shape_cast %66 : vector<1x1x8x128xf32> to vector<8x128xf32>
    %68 = vector.shape_cast %49 : vector<16x128xf32> to vector<2x8x128xf32>
    %cst_35 = arith.constant dense<0.000000e+00> : vector<8x128xf32>
    %69 = vector.multi_reduction <add>, %68, %cst_35 [0] : vector<2x8x128xf32> to vector<8x128xf32>
    %70 = arith.addf %67, %69 : vector<8x128xf32>
    %c0_36 = arith.constant 0 : index
    %c2_37 = arith.constant 2 : index
    %c0_38 = arith.constant 0 : index
    %c0_39 = arith.constant 0 : index
    %71 = vector.load %arg4[%c0_36, %c2_37, %c0_38, %c0_39] : memref<1x3x8x128xf32, #tpu.memory_space<vmem>>, vector<1x1x8x128xf32>
    %72 = vector.shape_cast %71 : vector<1x1x8x128xf32> to vector<8x128xf32>
    %73 = vector.shape_cast %70 : vector<8x128xf32> to vector<1x1x8x128xf32>
    tpu.vector_store %arg4[%c0_36, %c2_37, %c0_38, %c0_39], %73 {strides = array<i32>} : memref<1x3x8x128xf32, #tpu.memory_space<vmem>>, vector<1x1x8x128xf32>,
    return
  }
  func.func @transform_0(%arg0: i32, %arg1: i32) -> (i32, i32) {
    %c1_i32 = arith.constant 1 : i32
    %0 = arith.muli %arg0, %c1_i32 : i32
    %1 = arith.addi %0, %arg1 : i32
    %c0_i32 = arith.constant 0 : i32
    %c0_i32_0 = arith.constant 0 : i32
    return %1, %c0_i32 : i32, i32
  }
  func.func @transform_1(%arg0: i32, %arg1: i32) -> (i32, i32) {
    %c1_i32 = arith.constant 1 : i32
    %0 = arith.muli %arg0, %c1_i32 : i32
    %1 = arith.addi %0, %arg1 : i32
    %c0_i32 = arith.constant 0 : i32
    %c0_i32_0 = arith.constant 0 : i32
    return %1, %c0_i32 : i32, i32
  }
  func.func @transform_2(%arg0: i32, %arg1: i32) -> (i32, i32, i32, i32) {
    %c0_i32 = arith.constant 0 : i32
    %c0_i32_0 = arith.constant 0 : i32
    %c0_i32_1 = arith.constant 0 : i32
    %c0_i32_2 = arith.constant 0 : i32
    return %arg0, %c0_i32, %c0_i32_0, %c0_i32_1 : i32, i32, i32, i32
  }
}

</mosaic_0001>

<llo_original>
// kernel: tpu_custom_call.1
$region0: #{tpu_custom_call.1}
  #allocation0 [shape = 'u32[]', space=smem, size = 0x4, offset = 0x4, fixed_abs, tag = 'smem constant byte address 0x4 - core index']
  #allocation1 [shape = 'u32[144,128]{1,0:T(1,128)}', space=vmem, size = 0x12000, scoped, tag = 'internal scratch']
  %s0 = inlined_call_operand.hbm [shape: f32[32,128], index: 0, kind: input, shape index: {}]
  %s1 = inlined_call_operand.hbm [shape: f32[32,128], index: 1, kind: input, shape index: {}]
  %s2 = inlined_call_operand.hbm [shape: f32[2,3,8,128], index: 2, kind: output, shape index: {}]
  %s3 = sld [smem:[#allocation0]]
  $region53: #{tpu_custom_call.1} parent=0
    _
  %s5 = ssub.s32 1, %s3
  %s6 = scalar_select 0, %s5, %s3
  $region1: #{tpu_custom_call.1} parent=0
    #allocation2 [shape = 'u8[16384]{0}', space=vmem, size = 0x4000, scoped, tag = 'input window, operand 0']
    #allocation3 [shape = 's32[2]{0}', space=sflag, size = 0x8, scoped, tag = 'scoped memory for tpu_custom_call.1']
    #allocation4 [shape = 's32[2]{0}', space=sflag, size = 0x8, scoped, tag = 'scoped memory for tpu_custom_call.1']
    #allocation5 [shape = 'u8[16384]{0}', space=vmem, size = 0x4000, scoped, tag = 'input window, operand 1']
    #allocation6 [shape = 's32[2]{0}', space=sflag, size = 0x8, scoped, tag = 'scoped memory for tpu_custom_call.1']
    #allocation7 [shape = 'u8[24576]{0}', space=vmem, size = 0x6000, scoped, tag = 'output window, operand 0']
    %7 = vsyncpa [#allocation3], 0
    %s8 = scalar_lea.sflag [#allocation3], 1
    %9 = vsyncpa %s8, 0
    %10 = vsyncpa [#allocation6], 0
    %s11 = scalar_lea.sflag [#allocation6], 1
    %12 = vsyncpa %s11, 0
    %13 = vsyncpa [#allocation4], 0
    %s14 = scalar_lea.sflag [#allocation4], 1
    %15 = vsyncpa %s14, 0
    loop: start=0, step=1, limit=4
    $region2: #{tpu_custom_call.1} parent=1 // loop_pre_header
      _
    $region3: #{tpu_custom_call.1} parent=1 // loop_header
      %s17 = sphi 0, %s21
      %p18 = scmp.ge.s32.totalorder %s17, 4
      %s24 = sphi 0, %s36
      %s25 = sphi 0, %s32
      %s26 = sphi 0, %s24
      %s27 = sphi 0, %s25
      %s28 = sphi 0, %s26
      %s29 = sphi 0, %s27
      %s41 = sphi 0, %s43
      %s44 = sphi 0, %s41
      %s45 = sphi 0, %s44
      %s61 = sphi 0, %s45
      %s69 = sphi 0, %s71
      %s72 = sphi 0, %s69
      %s73 = sphi 0, %s72
      %s89 = sphi 0, %s73
      %s95 = sphi 0, %s97
      %s98 = sphi 0, %s95
      %s99 = sphi 0, %s98
      %s115 = sphi 0, %s99
    $region4: #{tpu_custom_call.1} parent=1 // loop_header_branch
      %20 = sbr.rel (%p18) target = $region8
    $region5: #{tpu_custom_call.1} parent=1 // loop_body
      %s22 = ssub.s32 %s17, 1
      %s23 = ssub.s32 %s17, 2
      %s30 = sadd.s32 1, %s25
      %p31 = scmp.ge.s32.totalorder %s30, 1
      %s32 = scalar_select %p31, 0, %s30
      %s33 = sadd.s32 1, %s24
      %s34 = scalar_select %p31, %s33, %s24
      %p35 = scmp.ge.s32.totalorder %s34, 2
      %s36 = scalar_select %p35, 0, %s34
      %s37 = sadd.s32 %s24, %s25
      %s38 = sadd.s32 %s36, %s32
      %s39 = ssub.s32 %s37, %s38
      %p40 = scmp.eq.s32.totalorder %s39, 0
      %s42 = sadd.s32 %s41, 1
      %s43 = scalar_select %p40, %s41, %s42
      %p46 = pneg %p40
      %p47 = scmp.eq.s32.totalorder %s17, 1
      %p48 = por %p46, %p47
      %p49 = scmp.ne.s32.totalorder %s41, %s44
      %p50 = scmp.eq.s32.totalorder %s17, 0
      %p51 = por %p49, %p50
      %p52 = scmp.ne.s32.totalorder %s41, %s44
      %p53 = scmp.eq.s32.totalorder %s22, 1
      %p54 = por %p52, %p53
      %p55 = scmp.ne.s32.totalorder %s44, %s45
      %p56 = scmp.eq.s32.totalorder %s22, 0
      %p57 = por %p55, %p56
      %p58 = scmp.ne.s32.totalorder %s44, %s45
      %p59 = scmp.eq.s32.totalorder %s23, 1
      %p60 = por %p58, %p59
      %p62 = scmp.ne.s32.totalorder %s45, %s61
      %p63 = scmp.eq.s32.totalorder %s23, 0
      %p64 = por %p62, %p63
      %s65 = sadd.s32 %s24, %s25
      %s66 = sadd.s32 %s36, %s32
      %s67 = ssub.s32 %s65, %s66
      %p68 = scmp.eq.s32.totalorder %s67, 0
      %s70 = sadd.s32 %s69, 1
      %s71 = scalar_select %p68, %s69, %s70
      %p74 = pneg %p68
      %p75 = scmp.eq.s32.totalorder %s17, 1
      %p76 = por %p74, %p75
      %p77 = scmp.ne.s32.totalorder %s69, %s72
      %p78 = scmp.eq.s32.totalorder %s17, 0
      %p79 = por %p77, %p78
      %p80 = scmp.ne.s32.totalorder %s69, %s72
      %p81 = scmp.eq.s32.totalorder %s22, 1
      %p82 = por %p80, %p81
      %p83 = scmp.ne.s32.totalorder %s72, %s73
      %p84 = scmp.eq.s32.totalorder %s22, 0
      %p85 = por %p83, %p84
      %p86 = scmp.ne.s32.totalorder %s72, %s73
      %p87 = scmp.eq.s32.totalorder %s23, 1
      %p88 = por %p86, %p87
      %p90 = scmp.ne.s32.totalorder %s73, %s89
      %p91 = scmp.eq.s32.totalorder %s23, 0
      %p92 = por %p90, %p91
      %s93 = ssub.s32 %s24, %s36
      %p94 = scmp.eq.s32.totalorder %s93, 0
      %s96 = sadd.s32 %s95, 1
      %s97 = scalar_select %p94, %s95, %s96
      %p100 = pneg %p94
      %p101 = scmp.eq.s32.totalorder %s17, 1
      %p102 = por %p100, %p101
      %p103 = scmp.ne.s32.totalorder %s95, %s98
      %p104 = scmp.eq.s32.totalorder %s17, 0
      %p105 = por %p103, %p104
      %p106 = scmp.ne.s32.totalorder %s95, %s98
      %p107 = scmp.eq.s32.totalorder %s22, 1
      %p108 = por %p106, %p107
      %p109 = scmp.ne.s32.totalorder %s98, %s99
      %p110 = scmp.eq.s32.totalorder %s22, 0
      %p111 = por %p109, %p110
      %p112 = scmp.ne.s32.totalorder %s98, %s99
      %p113 = scmp.eq.s32.totalorder %s23, 1
      %p114 = por %p112, %p113
      %p116 = scmp.ne.s32.totalorder %s99, %s115
      %p117 = scmp.eq.s32.totalorder %s23, 0
      %p118 = por %p116, %p117
      %p119 = scmp.le.s32.totalorder 1, %s17
      %p120 = scmp.lt.s32.totalorder %s17, 3
      %p121 = pnand %p119, %p120
      %p122 = pneg %p121
      // Predicated region
      $region9: #{tpu_custom_call.1} parent=5 // pred_check
        _
      $region10: #{tpu_custom_call.1} parent=5 // pred_check_branch
        %124 = sbr.rel (%p121) target = $region12
      $region11: #{tpu_custom_call.1} parent=5 // pred_region
        %s125 = ssub.s32 %s17, 1
      $region12: #{tpu_custom_call.1} parent=5 // pred_fallthru
        _
      %p126 = scmp.lt.s32.totalorder %s17, 2
      // Predicated region
      $region13: #{tpu_custom_call.1} parent=5 // pred_check
        %p127 = pneg %p126
      $region14: #{tpu_custom_call.1} parent=5 // pred_check_branch
        %129 = sbr.rel (%p127) target = $region16
      $region15: #{tpu_custom_call.1} parent=5 // pred_region
        // Predicated region
        $region17: #{tpu_custom_call.1} parent=15 // pred_check
          %p130 = pneg %p51
        $region18: #{tpu_custom_call.1} parent=15 // pred_check_branch
          %132 = sbr.rel (%p130) target = $region20
        $region19: #{tpu_custom_call.1} parent=15 // pred_region
          %s133 = sand.u32 %s41, 1
          %s134 = scalar_lea.sflag [#allocation3], %s133
          %s135 = sand.u32 %s41, 1
          %s136 = smul.addr %s135, 16
          %s137 = scalar_lea.vmem [#allocation2], %s136
          %s138 = sadd.s32 %s24, %s25
          %s139 = smul.u32 2, %s138
          %s141 = ssub.s32 256, 256
          %142 = vsyncadd %s134, %s141
          %s143 = smul.addr %s139, 128
          %s144 = scalar_lea.hbm %s0, %s143
          %s145 = sshll.u32 %s137, 4
          %s146 = int_to_ptr.vmem [resolvable:$true] %s145
          %151 = dma.hbm_to_vmem [thread:$0]  %s144, 256, %s146, %s134, 128, 128, 8
        $region20: #{tpu_custom_call.1} parent=15 // pred_fallthru
          _
        // Predicated region
        $region21: #{tpu_custom_call.1} parent=15 // pred_check
          %p152 = pneg %p79
        $region22: #{tpu_custom_call.1} parent=15 // pred_check_branch
          %154 = sbr.rel (%p152) target = $region24
        $region23: #{tpu_custom_call.1} parent=15 // pred_region
          %s155 = sand.u32 %s69, 1
          %s156 = scalar_lea.sflag [#allocation6], %s155
          %s157 = sand.u32 %s69, 1
          %s158 = smul.addr %s157, 16
          %s159 = scalar_lea.vmem [#allocation5], %s158
          %s160 = sadd.s32 %s24, %s25
          %s161 = smul.u32 2, %s160
          %s163 = ssub.s32 256, 256
          %164 = vsyncadd %s156, %s163
          %s165 = smul.addr %s161, 128
          %s166 = scalar_lea.hbm %s1, %s165
          %s167 = sshll.u32 %s159, 4
          %s168 = int_to_ptr.vmem [resolvable:$true] %s167
          %173 = dma.hbm_to_vmem [thread:$0]  %s166, 256, %s168, %s156, 128, 128, 8
        $region24: #{tpu_custom_call.1} parent=15 // pred_fallthru
          _
      $region16: #{tpu_custom_call.1} parent=5 // pred_fallthru
        _
      %p174 = scmp.le.s32.totalorder 1, %s17
      %p175 = scmp.lt.s32.totalorder %s17, 3
      %p176 = pnand %p174, %p175
      %p177 = pneg %p176
      // Predicated region
      $region25: #{tpu_custom_call.1} parent=5 // pred_check
        _
      $region26: #{tpu_custom_call.1} parent=5 // pred_check_branch
        %179 = sbr.rel (%p176) target = $region28
      $region27: #{tpu_custom_call.1} parent=5 // pred_region
        %s180 = ssub.s32 %s17, 1
        %s181 = sand.u32 %s44, 1
        %s182 = scalar_lea.sflag [#allocation3], %s181
        %s183 = sand.u32 %s44, 1
        %s184 = smul.addr %s183, 16
        %s185 = scalar_lea.vmem [#allocation2], %s184
        // Predicated region
        $region29: #{tpu_custom_call.1} parent=27 // pred_check
          %p186 = pneg %p57
        $region30: #{tpu_custom_call.1} parent=27 // pred_check_branch
          %188 = sbr.rel (%p186) target = $region32
        $region31: #{tpu_custom_call.1} parent=27 // pred_region
          %189 = dma.done %s182, 256
        $region32: #{tpu_custom_call.1} parent=27 // pred_fallthru
          _
        %s190 = sand.u32 %s72, 1
        %s191 = scalar_lea.sflag [#allocation6], %s190
        %s192 = sand.u32 %s72, 1
        %s193 = smul.addr %s192, 16
        %s194 = scalar_lea.vmem [#allocation5], %s193
        // Predicated region
        $region33: #{tpu_custom_call.1} parent=27 // pred_check
          %p195 = pneg %p85
        $region34: #{tpu_custom_call.1} parent=27 // pred_check_branch
          %197 = sbr.rel (%p195) target = $region36
        $region35: #{tpu_custom_call.1} parent=27 // pred_region
          %198 = dma.done %s191, 256
        $region36: #{tpu_custom_call.1} parent=27 // pred_fallthru
          _
        %s199 = sand.u32 %s44, 1
        %s200 = scalar_lea.sflag [#allocation3], %s199
        %s201 = sand.u32 %s44, 1
        %s202 = smul.addr %s201, 16
        %s203 = scalar_lea.vmem [#allocation2], %s202
        %p204 = pneg %p57
        %p205 = pneg %p54
        %s206 = sand.u32 %s72, 1
        %s207 = scalar_lea.sflag [#allocation6], %s206
        %s208 = sand.u32 %s72, 1
        %s209 = smul.addr %s208, 16
        %s210 = scalar_lea.vmem [#allocation5], %s209
        %p211 = pneg %p85
        %p212 = pneg %p82
        %p213 = pneg %p111
        %p214 = pneg %p108
        %s215 = sand.u32 %s98, 1
        %s216 = scalar_lea.sflag [#allocation4], %s215
        %s217 = sand.u32 %s98, 1
        %s218 = smul.addr %s217, 24
        %s219 = scalar_lea.vmem [#allocation7], %s218
        %s220 = sadd.s32 %s26, %s27
        %s221 = smul.u32 2, %s220
        %s222 = sadd.s32 %s26, %s27
        %s223 = smul.u32 2, %s222
        %p224 = scmp.eq.s32.totalorder %s27, 0
        // Predicated region
        $region37: #{tpu_custom_call.1} parent=27 // pred_check
          %p225 = pneg %p224
        $region38: #{tpu_custom_call.1} parent=27 // pred_check_branch
          %227 = sbr.rel (%p225) target = $region40
        $region39: #{tpu_custom_call.1} parent=27 // pred_region
          %228 = vst [vmem:[%s219] sm:$0xff] 0.0
          %229 = vst [vmem:[%s219 + $0x8] sm:$0xff] 0.0
          %230 = vst [vmem:[%s219 + $0x10] sm:$0xff] 0.0
        $region40: #{tpu_custom_call.1} parent=27 // pred_fallthru
          _
        %v231 = vld [vmem:[%s185] sm:$0xff]
        %v232 = vld [vmem:[%s185 + $0x8] sm:$0xff]
        %v233 = vmax.f32 %v231, 0.0001
        %v234 = vmax.f32 %v232, 0.0001
        %v235 = vmin.f32 %v233, 0.9999
        %v236 = vmin.f32 %v234, 0.9999
        %v237 = vld [vmem:[%s194] sm:$0xff]
        %v238 = vld [vmem:[%s194 + $0x8] sm:$0xff]
        %s239 = sadd.s32 %s26, %s27
        %s240 = smul.u32 %s239, 16
        %v241 = vlaneseq
        %v242 = vshrl.u32 %v241, 7
        %v243 = vadd.s32 %v242, 8
        %v244 = vstv %s240
        %v245 = vadd.s32 %v242, %v244
        %v246 = vadd.s32 %v243, %v244
        %v247 = vlaneseq
        %v248 = vand.u32 %v247, 127
        %v249 = vmul.u32 %v245, 128
        %v250 = vmul.u32 %v246, 128
        %v251 = vadd.s32 %v249, %v248
        %v252 = vadd.s32 %v250, %v248
        %vm253 = vcmp.lt.s32.totalorder %v251, 2048
        %vm254 = vcmp.lt.s32.totalorder %v252, 2048
        %v255 = vlog2.pop %v235
        %v256 = vmul.f32 %v255, 0.6931472
        %v257 = vlog2.pop %v236
        %v258 = vmul.f32 %v257, 0.6931472
        %v259 = vmul.f32 %v237, %v256
        %v260 = vmul.f32 %v238, %v258
        %v261 = vsub.f32 1.0, %v237
        %v262 = vsub.f32 1.0, %v238
        %v263 = vsub.f32 1.0, %v235
        %v264 = vsub.f32 1.0, %v236
        %v265 = vlog2.pop %v263
        %v266 = vmul.f32 %v265, 0.6931472
        %v267 = vlog2.pop %v264
        %v268 = vmul.f32 %v267, 0.6931472
        %v269 = vmul.f32 %v261, %v266
        %v270 = vmul.f32 %v262, %v268
        %v271 = vadd.f32 %v259, %v269
        %v272 = vadd.f32 %v260, %v270
        %v273 = vsub.f32 0.0, %v271
        %v274 = vsub.f32 0.0, %v272
        %vm275 = vcmp.eq.f32.partialorder %v237, 1.0
        %vm276 = vcmp.eq.f32.partialorder %v238, 1.0
        %v277 = vsel %vm275, %v263, %v235
        %v278 = vsel %vm276, %v264, %v236
        %v279 = vmul.f32 %v277, %v277
        %v280 = vmul.f32 %v278, %v278
        %v281 = vmul.f32 %v279, 0.5
        %v282 = vmul.f32 %v280, 0.5
        %vm283 = vcmp.ne.f32.partialorder %v237, -1.0
        %vm284 = vcmp.ne.f32.partialorder %v238, -1.0
        %v285 = vsel %vm283, %v281, 0.0
        %v286 = vsel %vm284, %v282, 0.0
        %v287 = vsel %vm253, %v273, 0.0
        %v288 = vsel %vm254, %v274, 0.0
        %v289 = vsel %vm253, %v285, 0.0
        %v290 = vsel %vm254, %v286, 0.0
        %v291 = vsel %vm253, %v237, 0.0
        %v292 = vsel %vm254, %v238, 0.0
        %v293 = vld [vmem:[%s219] sm:$0xff]
        %v294 = vadd.f32 %v287, %v288
        %v295 = vadd.f32 %v293, %v294
        %296 = vst [vmem:[%s219] sm:$0xff] %v295
        %s297 = scalar_lea.vmem %s219, 8 [#allocation7]
        %v298 = vld [vmem:[%s297] sm:$0xff]
        %v299 = vadd.f32 %v289, %v290
        %v300 = vadd.f32 %v298, %v299
        %301 = vst [vmem:[%s297] sm:$0xff] %v300
        %s302 = scalar_lea.vmem %s219, 16 [#allocation7]
        %v303 = vld [vmem:[%s302] sm:$0xff]
        %v304 = vadd.f32 %v291, %v292
        %v305 = vadd.f32 %v303, %v304
        %306 = vst [vmem:[%s302] sm:$0xff] %v305
        %s307 = sand.u32 %s98, 1
        %s308 = scalar_lea.sflag [#allocation4], %s307
        %s309 = sand.u32 %s98, 1
        %s310 = smul.addr %s309, 24
        %s311 = scalar_lea.vmem [#allocation7], %s310
        // Predicated region
        $region41: #{tpu_custom_call.1} parent=27 // pred_check
          %p312 = pneg %p108
        $region42: #{tpu_custom_call.1} parent=27 // pred_check_branch
          %314 = sbr.rel (%p312) target = $region44
        $region43: #{tpu_custom_call.1} parent=27 // pred_region
          %s316 = ssub.s32 384, 384
          %317 = vsyncadd %s308, %s316
          %s318 = smul.addr %s26, 3
          %s319 = smul.addr %s318, 128
          %s320 = scalar_lea.hbm %s2, %s319
          %s321 = sshll.u32 %s311, 4
          %s322 = int_to_ptr.vmem [resolvable:$true] %s321
          %327 = dma.vmem_to_hbm [thread:$0]  %s322, 384, %s320, %s308, 128, 128, 8
        $region44: #{tpu_custom_call.1} parent=27 // pred_fallthru
          _
      $region28: #{tpu_custom_call.1} parent=5 // pred_fallthru
        _
      %p328 = scmp.le.s32.totalorder 2, %s17
      // Predicated region
      $region45: #{tpu_custom_call.1} parent=5 // pred_check
        %p329 = pneg %p328
      $region46: #{tpu_custom_call.1} parent=5 // pred_check_branch
        %331 = sbr.rel (%p329) target = $region48
      $region47: #{tpu_custom_call.1} parent=5 // pred_region
        %s332 = ssub.s32 %s17, 2
        // Predicated region
        $region49: #{tpu_custom_call.1} parent=47 // pred_check
          %p333 = pneg %p114
        $region50: #{tpu_custom_call.1} parent=47 // pred_check_branch
          %335 = sbr.rel (%p333) target = $region52
        $region51: #{tpu_custom_call.1} parent=47 // pred_region
          %s336 = sand.u32 %s99, 1
          %s337 = scalar_lea.sflag [#allocation4], %s336
          %s338 = sand.u32 %s99, 1
          %s339 = smul.addr %s338, 24
          %s340 = scalar_lea.vmem [#allocation7], %s339
          %341 = dma.done %s337, 384
        $region52: #{tpu_custom_call.1} parent=47 // pred_fallthru
          _
      $region48: #{tpu_custom_call.1} parent=5 // pred_fallthru
        _
    $region6: #{tpu_custom_call.1} parent=1 // loop_footer
      %s21 = sadd.s32 1, %s17
    $region7: #{tpu_custom_call.1} parent=1 // loop_footer_branch
      %16 = sbr.rel target = $region3
    $region8: #{tpu_custom_call.1} parent=1 // loop_exit
      _
    %342 = vsyncpa [#allocation3], 1
    %s343 = scalar_lea.sflag [#allocation3], 1
    %344 = vsyncpa %s343, 1
    %345 = vsyncpa [#allocation6], 1
    %s346 = scalar_lea.sflag [#allocation6], 1
    %347 = vsyncpa %s346, 1
    %348 = vsyncpa [#allocation4], 1
    %s349 = scalar_lea.sflag [#allocation4], 1
    %350 = vsyncpa %s349, 1

</llo_original>
